<compile_context>
chip_gen: v5e
topology: v5e:2x2
jax: 0.10.0
libtpu: 0.0.40
codegen_flags: <defaults>
</compile_context>

<pallas_src>
import jax
import jax.numpy as jnp
from jax.experimental import pallas as pl
from jax.experimental.pallas import tpu as pltpu


def _nw_kernel(w_ref, q_ref, k_ref, v_ref, o_ref):
    # w_ref: (1,1) f32 in SMEM; q_ref: (T,1); k_ref/v_ref: (T,M); o_ref: (T,1) f32
    w = w_ref[0, 0]
    c = -0.5 * w * w                               # scale folded into one scalar

    q = q_ref[...].astype(jnp.float32)             # (T, 1)
    k = k_ref[...].astype(jnp.float32)             # (T, M)  upcast in-kernel so bf16
    v = v_ref[...].astype(jnp.float32)             # (T, M)  callers save HBM bytes

    d = q - k                                      # (T, M)  VPU
    s = c * (d * d)                                # (T, M)  VPU, s <= 0

    # Numerically-stable softmax along the key axis, division deferred to the end.
    s_max = jnp.max(s, axis=1, keepdims=True)      # (T, 1)  the only XLU lane-reduce
    e = jnp.exp(s - s_max)                         # (T, M)  EUP

    # Row sums on the otherwise-idle MXU instead of two more XLU lane-reduces.
    ones = jnp.ones((k.shape[1], 1), jnp.float32)
    denom = jnp.dot(e, ones, preferred_element_type=jnp.float32)     # (T, 1)
    num = jnp.dot(e * v, ones, preferred_element_type=jnp.float32)   # (T, 1)

    # Single small multiply by the approximate reciprocal (EUP; ~1e-3 rel err).
    o_ref[...] = num * pl.reciprocal(denom, approx=True)


def _round_up(x, k):
    return (x + k - 1) // k * k


def _vmem_capacity_bytes():
    try:
        info = pltpu.get_tpu_info()
        cap = getattr(info, "vmem_capacity_bytes", None)
        if cap:
            return int(cap)
    except Exception:
        pass
    return 64 * 1024 * 1024   # conservative fallback (v7x per-TC VMEM)


def nw_kernel_regression(w, queries, keys, values):
    """Pallas forward for NWKernelRegression.

    w: scalar (or shape-(1,)) parameter.
    queries: (N,); keys, values: (N, M) (f32 or bf16, passed through untouched).
    Returns: (N,) f32.
    """
    n, m = keys.shape

    # Sublane alignment for the row axis: 8 for 32-bit inputs, 16 if any 16-bit.
    itemsizes = [jnp.dtype(a.dtype).itemsize for a in (queries, keys, values)]
    align = 8 if min(itemsizes) >= 4 else 16

    # --- per-generation VMEM budget ------------------------------------------
    vmem_cap = _vmem_capacity_bytes()
    if vmem_cap >= 128 * 1024 * 1024:      # v5e / v6e: 128 MiB physical VMEM
        budget_elems = 2 << 20             # ~32 MiB of double-buffered f32 inputs
        vmem_limit = 64 * 1024 * 1024
    else:                                  # v7x: 64 MiB per TensorCore
        budget_elems = 1 << 20             # ~16 MiB of double-buffered f32 inputs
        vmem_limit = 40 * 1024 * 1024

    budget_rows = max(align, (budget_elems // max(m, 1)) // align * align)
    # Aim for >= 2 grid steps so both v7x TensorCores get work on small N.
    half_rows = max(align, _round_up(pl.cdiv(n, 2), align))
    tile_n = max(align, min(1024, budget_rows, half_rows))
    grid = pl.cdiv(n, tile_n)

    q2 = queries.reshape(n, 1)                       # metadata-only reshape, no copy
    w2 = jnp.asarray(w, jnp.float32).reshape(1, 1)

    out = pl.pallas_call(
        _nw_kernel,
        out_shape=jax.ShapeDtypeStruct((n, 1), jnp.float32),
        grid=(grid,),
        in_specs=[
            pl.BlockSpec(memory_space=pltpu.SMEM),             # w scalar (1,1)
            pl.BlockSpec((tile_n, 1), lambda i: (i, 0)),       # queries tile
            pl.BlockSpec((tile_n, m), lambda i: (i, 0)),       # keys tile
            pl.BlockSpec((tile_n, m), lambda i: (i, 0)),       # values tile
        ],
        out_specs=pl.BlockSpec((tile_n, 1), lambda i: (i, 0)),
        compiler_params=pltpu.CompilerParams(
            dimension_semantics=("parallel",),
            vmem_limit_bytes=vmem_limit,
        ),
    )(w2, q2, keys, values)

    return out[:, 0]


def _reference(w, queries, keys, values):
    q = queries[:, None]
    s = -((q - keys) * w) ** 2 / 2
    attn = jax.nn.softmax(s, axis=1)
    return jnp.sum(attn * values, axis=1)


def f(x):
    return 2.0 * jnp.sin(x) + x ** 0.8


if __name__ == "__main__":
    key = jax.random.PRNGKey(0)
    k_w, k_x, k_noise = jax.random.split(key, 3)

    # Deterministic parameter init: w ~ U[0,1), shape (1,) as in
    # nn.Parameter(torch.rand((1,))).
    w = jax.random.uniform(k_w, (1,), dtype=jnp.float32)

    # Training / test data consistent with the script around the module.
    n_train = 50
    x_train = jnp.sort(jax.random.uniform(k_x, (n_train,), dtype=jnp.float32) * 5.0)
    y_train = f(x_train) + 0.5 * jax.random.normal(k_noise, (n_train,), dtype=jnp.float32)

    x_test = jnp.arange(0.0, 5.0, 0.1, dtype=jnp.float32)   # (50,)
    n_test = x_test.shape[0]

    keys = jnp.tile(x_train, (n_test, 1))     # (n_test, n_train)
    values = jnp.tile(y_train, (n_test, 1))   # (n_test, n_train)

    out = nw_kernel_regression(w, x_test, keys, values)
    out = jax.block_until_ready(out)

    ref = _reference(w[0], x_test, keys, values)
    assert out.shape == (n_test,)
    # Tolerance accounts for the EUP approximate reciprocal (approx=True).
    assert jnp.allclose(out, ref, rtol=1e-2, atol=1e-2), (out, ref)

    print("KERNEL_OK")
</pallas_src>

<mosaic_0001>
module attributes {stable_mosaic.version = 11 : i64} {
  func.func @_nw_kernel(%arg0: i32, %arg1: memref<1x1xf32, #tpu.memory_space<smem>>, %arg2: memref<32x1xf32, #tpu.memory_space<vmem>>, %arg3: memref<32x50xf32, #tpu.memory_space<vmem>>, %arg4: memref<32x50xf32, #tpu.memory_space<vmem>>, %arg5: memref<32x1xf32, #tpu.memory_space<vmem>>) attributes {dimension_semantics = [#tpu.dimension_semantics<parallel>], iteration_bounds = array<i64: 2>, scalar_prefetch = 0 : i64, scratch_operands = 0 : i64, tpu.core_type = #tpu.core_type<tc>, window_params = [{transform_indices = @transform_0, window_bounds = array<i64: 1, 1>}, {transform_indices = @transform_1, window_bounds = array<i64: 32, 1>}, {transform_indices = @transform_2, window_bounds = array<i64: 32, 50>}, {transform_indices = @transform_3, window_bounds = array<i64: 32, 50>}, {transform_indices = @transform_4, window_bounds = array<i64: 32, 1>}]} {
    %c0 = arith.constant 0 : index
    %c0_0 = arith.constant 0 : index
    %0 = memref.load %arg1[%c0, %c0_0] : memref<1x1xf32, #tpu.memory_space<smem>>
    %cst = arith.constant -5.000000e-01 : f32
    %1 = arith.mulf %cst, %0 : f32
    %2 = arith.mulf %1, %0 : f32
    %c0_1 = arith.constant 0 : index
    %c0_2 = arith.constant 0 : index
    %3 = vector.load %arg2[%c0_1, %c0_2] : memref<32x1xf32, #tpu.memory_space<vmem>>, vector<32x1xf32>
    %c0_3 = arith.constant 0 : index
    %c0_4 = arith.constant 0 : index
    %4 = vector.load %arg3[%c0_3, %c0_4] : memref<32x50xf32, #tpu.memory_space<vmem>>, vector<32x50xf32>
    %c0_5 = arith.constant 0 : index
    %c0_6 = arith.constant 0 : index
    %5 = vector.load %arg4[%c0_5, %c0_6] : memref<32x50xf32, #tpu.memory_space<vmem>>, vector<32x50xf32>
    %6 = vector.broadcast %3 : vector<32x1xf32> to vector<32x50xf32>
    %7 = arith.subf %6, %4 : vector<32x50xf32>
    %8 = arith.mulf %7, %7 : vector<32x50xf32>
    %9 = vector.broadcast %2 : f32 to vector<32x50xf32>
    %10 = arith.mulf %9, %8 : vector<32x50xf32>
    %cst_7 = arith.constant dense<0xFF800000> : vector<32xf32>
    %11 = vector.multi_reduction <maximumf>, %10, %cst_7 [1] : vector<32x50xf32> to vector<32xf32>
    %12 = vector.shape_cast %11 : vector<32xf32> to vector<32x1xf32>
    %13 = vector.broadcast %12 : vector<32x1xf32> to vector<32x50xf32>
    %14 = arith.subf %10, %13 : vector<32x50xf32>
    %15 = math.exp %14 : vector<32x50xf32>
    %cst_8 = arith.constant 1.000000e+00 : f32
    %16 = vector.broadcast %cst_8 : f32 to vector<50x1xf32>
    %cst_9 = arith.constant dense<0.000000e+00> : vector<32x1xf32>
    %17 = tpu.matmul %15, %16, %cst_9 {dimension_numbers = #tpu.dot_dimension_numbers<[1], [0], [0], [1], [0, 0, 1, 1], [], []>} : vector<32x50xf32>, vector<50x1xf32>, vector<32x1xf32> -> vector<32x1xf32>
    %18 = arith.mulf %15, %5 : vector<32x50xf32>
    %cst_10 = arith.constant dense<0.000000e+00> : vector<32x1xf32>
    %19 = tpu.matmul %18, %16, %cst_10 {dimension_numbers = #tpu.dot_dimension_numbers<[1], [0], [0], [1], [0, 0, 1, 1], [], []>} : vector<32x50xf32>, vector<50x1xf32>, vector<32x1xf32> -> vector<32x1xf32>
    %20 = tpu.reciprocal %17 {approx = true} : vector<32x1xf32> -> vector<32x1xf32>
    %21 = arith.mulf %19, %20 : vector<32x1xf32>
    %c0_11 = arith.constant 0 : index
    %c0_12 = arith.constant 0 : index
    %22 = vector.load %arg5[%c0_11, %c0_12] : memref<32x1xf32, #tpu.memory_space<vmem>>, vector<32x1xf32>
    tpu.vector_store %arg5[%c0_11, %c0_12], %21 {strides = array<i32>} : memref<32x1xf32, #tpu.memory_space<vmem>>, vector<32x1xf32>,
    return
  }
  func.func @transform_0(%arg0: i32) -> (i32, i32) {
    %c0_i32 = arith.constant 0 : i32
    %c0_i32_0 = arith.constant 0 : i32
    %c0_i32_1 = arith.constant 0 : i32
    return %c0_i32, %c0_i32_0 : i32, i32
  }
  func.func @transform_1(%arg0: i32) -> (i32, i32) {
    %c0_i32 = arith.constant 0 : i32
    %c0_i32_0 = arith.constant 0 : i32
    return %arg0, %c0_i32 : i32, i32
  }
  func.func @transform_2(%arg0: i32) -> (i32, i32) {
    %c0_i32 = arith.constant 0 : i32
    %c0_i32_0 = arith.constant 0 : i32
    return %arg0, %c0_i32 : i32, i32
  }
  func.func @transform_3(%arg0: i32) -> (i32, i32) {
    %c0_i32 = arith.constant 0 : i32
    %c0_i32_0 = arith.constant 0 : i32
    return %arg0, %c0_i32 : i32, i32
  }
  func.func @transform_4(%arg0: i32) -> (i32, i32) {
    %c0_i32 = arith.constant 0 : i32
    %c0_i32_0 = arith.constant 0 : i32
    return %arg0, %c0_i32 : i32, i32
  }
}

</mosaic_0001>

<llo_original>
// kernel: tpu_custom_call.1
$region0: #{tpu_custom_call.1}
  #allocation0 [shape = 'u32[]', space=smem, size = 0x4, offset = 0x4, fixed_abs, tag = 'smem constant byte address 0x4 - core index']
  #allocation1 [shape = 'u32[72,128]{1,0:T(1,128)}', space=vmem, size = 0x9000, scoped, tag = 'internal scratch']
  #allocation2 [shape = 'f32[1,1]{1,0:T(1,128)S(6)}', space=smem, size = 0x200, scoped, tag = 'scoped memory for tpu_custom_call.1']
  %s0 = inlined_call_operand.<no memory space> [shape: f32[1,1], index: 0, kind: input, shape index: {}]
  %s1 = inlined_call_operand.vmem [shape: f32[50,1], index: 1, kind: input, shape index: {}]
  %s2 = inlined_call_operand.vmem [shape: f32[50,50], index: 2, kind: input, shape index: {}]
  %s3 = inlined_call_operand.hbm [shape: f32[50,50], index: 3, kind: input, shape index: {}]
  %s4 = inlined_call_operand.vmem [shape: f32[50,1], index: 4, kind: output, shape index: {}]
  %s5 = sld [smem:[#allocation0]]
  $region101: #{tpu_custom_call.1} parent=0
    _
  %s7 = ssub.s32 1, %s5
  %s8 = scalar_select 0, %s7, %s5
  %9 = sst [smem:[#allocation2]] %s0
  $region1: #{tpu_custom_call.1} parent=0
    #allocation3 [shape = 'u8[32768]{0}', space=vmem, size = 0x8000, scoped, tag = 'input window, operand 3']
    #allocation4 [shape = 's32[2]{0}', space=sflag, size = 0x8, scoped, tag = 'scoped memory for tpu_custom_call.1']
    #allocation5 [shape = 'u8[32768]{0}', space=vmem, size = 0x8000, scoped, tag = 'output window, operand 0']
    %10 = vsyncpa [#allocation4], 0
    %s11 = scalar_lea.sflag [#allocation4], 1
    %12 = vsyncpa %s11, 0
    loop: start=0, step=1, limit=4
    $region2: #{tpu_custom_call.1} parent=1 // loop_pre_header
      _
    $region3: #{tpu_custom_call.1} parent=1 // loop_header
      %s14 = sphi 0, %s18
      %p15 = scmp.ge.s32.totalorder %s14, 4
      %s22 = sphi 0, %s22
      %s24 = sphi 0, %s22
      %s25 = sphi 0, %s24
      %s39 = sphi 0, %s25
      %s45 = sphi 0, %s47
      %s48 = sphi 0, %s45
      %s49 = sphi 0, %s48
      %s65 = sphi 0, %s49
      %s71 = sphi 0, %s73
      %s74 = sphi 0, %s71
      %s75 = sphi 0, %s74
      %s91 = sphi 0, %s75
      %s97 = sphi 0, %s99
      %s100 = sphi 0, %s97
      %s101 = sphi 0, %s100
      %s117 = sphi 0, %s101
      %s123 = sphi 0, %s125
      %s126 = sphi 0, %s123
      %s127 = sphi 0, %s126
      %s143 = sphi 0, %s127
    $region4: #{tpu_custom_call.1} parent=1 // loop_header_branch
      %17 = sbr.rel (%p15) target = $region8
    $region5: #{tpu_custom_call.1} parent=1 // loop_body
      %s19 = ssub.s32 %s14, 1
      %s20 = ssub.s32 %s14, 2
      %s21 = sadd.s32 %s14, 1
      %s23 = sadd.s32 %s22, 1
      %p26 = scmp.eq.s32.totalorder %s14, 1
      %p27 = scmp.ne.s32.totalorder %s22, %s24
      %p28 = scmp.eq.s32.totalorder %s14, 0
      %p29 = por %p27, %p28
      %p30 = scmp.ne.s32.totalorder %s22, %s24
      %p31 = scmp.eq.s32.totalorder %s19, 1
      %p32 = por %p30, %p31
      %p33 = scmp.ne.s32.totalorder %s24, %s25
      %p34 = scmp.eq.s32.totalorder %s19, 0
      %p35 = por %p33, %p34
      %p36 = scmp.ne.s32.totalorder %s24, %s25
      %p37 = scmp.eq.s32.totalorder %s20, 1
      %p38 = por %p36, %p37
      %p40 = scmp.ne.s32.totalorder %s25, %s39
      %p41 = scmp.eq.s32.totalorder %s20, 0
      %p42 = por %p40, %p41
      %s43 = ssub.s32 %s14, %s21
      %p44 = scmp.eq.s32.totalorder %s43, 0
      %s46 = sadd.s32 %s45, 1
      %s47 = scalar_select %p44, %s45, %s46
      %p50 = pneg %p44
      %p51 = scmp.eq.s32.totalorder %s14, 1
      %p52 = por %p50, %p51
      %p53 = scmp.ne.s32.totalorder %s45, %s48
      %p54 = scmp.eq.s32.totalorder %s14, 0
      %p55 = por %p53, %p54
      %p56 = scmp.ne.s32.totalorder %s45, %s48
      %p57 = scmp.eq.s32.totalorder %s19, 1
      %p58 = por %p56, %p57
      %p59 = scmp.ne.s32.totalorder %s48, %s49
      %p60 = scmp.eq.s32.totalorder %s19, 0
      %p61 = por %p59, %p60
      %p62 = scmp.ne.s32.totalorder %s48, %s49
      %p63 = scmp.eq.s32.totalorder %s20, 1
      %p64 = por %p62, %p63
      %p66 = scmp.ne.s32.totalorder %s49, %s65
      %p67 = scmp.eq.s32.totalorder %s20, 0
      %p68 = por %p66, %p67
      %s69 = ssub.s32 %s14, %s21
      %p70 = scmp.eq.s32.totalorder %s69, 0
      %s72 = sadd.s32 %s71, 1
      %s73 = scalar_select %p70, %s71, %s72
      %p76 = pneg %p70
      %p77 = scmp.eq.s32.totalorder %s14, 1
      %p78 = por %p76, %p77
      %p79 = scmp.ne.s32.totalorder %s71, %s74
      %p80 = scmp.eq.s32.totalorder %s14, 0
      %p81 = por %p79, %p80
      %p82 = scmp.ne.s32.totalorder %s71, %s74
      %p83 = scmp.eq.s32.totalorder %s19, 1
      %p84 = por %p82, %p83
      %p85 = scmp.ne.s32.totalorder %s74, %s75
      %p86 = scmp.eq.s32.totalorder %s19, 0
      %p87 = por %p85, %p86
      %p88 = scmp.ne.s32.totalorder %s74, %s75
      %p89 = scmp.eq.s32.totalorder %s20, 1
      %p90 = por %p88, %p89
      %p92 = scmp.ne.s32.totalorder %s75, %s91
      %p93 = scmp.eq.s32.totalorder %s20, 0
      %p94 = por %p92, %p93
      %s95 = ssub.s32 %s14, %s21
      %p96 = scmp.eq.s32.totalorder %s95, 0
      %s98 = sadd.s32 %s97, 1
      %s99 = scalar_select %p96, %s97, %s98
      %p102 = pneg %p96
      %p103 = scmp.eq.s32.totalorder %s14, 1
      %p104 = por %p102, %p103
      %p105 = scmp.ne.s32.totalorder %s97, %s100
      %p106 = scmp.eq.s32.totalorder %s14, 0
      %p107 = por %p105, %p106
      %p108 = scmp.ne.s32.totalorder %s97, %s100
      %p109 = scmp.eq.s32.totalorder %s19, 1
      %p110 = por %p108, %p109
      %p111 = scmp.ne.s32.totalorder %s100, %s101
      %p112 = scmp.eq.s32.totalorder %s19, 0
      %p113 = por %p111, %p112
      %p114 = scmp.ne.s32.totalorder %s100, %s101
      %p115 = scmp.eq.s32.totalorder %s20, 1
      %p116 = por %p114, %p115
      %p118 = scmp.ne.s32.totalorder %s101, %s117
      %p119 = scmp.eq.s32.totalorder %s20, 0
      %p120 = por %p118, %p119
      %s121 = ssub.s32 %s14, %s21
      %p122 = scmp.eq.s32.totalorder %s121, 0
      %s124 = sadd.s32 %s123, 1
      %s125 = scalar_select %p122, %s123, %s124
      %p128 = pneg %p122
      %p129 = scmp.eq.s32.totalorder %s14, 1
      %p130 = por %p128, %p129
      %p131 = scmp.ne.s32.totalorder %s123, %s126
      %p132 = scmp.eq.s32.totalorder %s14, 0
      %p133 = por %p131, %p132
      %p134 = scmp.ne.s32.totalorder %s123, %s126
      %p135 = scmp.eq.s32.totalorder %s19, 1
      %p136 = por %p134, %p135
      %p137 = scmp.ne.s32.totalorder %s126, %s127
      %p138 = scmp.eq.s32.totalorder %s19, 0
      %p139 = por %p137, %p138
      %p140 = scmp.ne.s32.totalorder %s126, %s127
      %p141 = scmp.eq.s32.totalorder %s20, 1
      %p142 = por %p140, %p141
      %p144 = scmp.ne.s32.totalorder %s127, %s143
      %p145 = scmp.eq.s32.totalorder %s20, 0
      %p146 = por %p144, %p145
      %p147 = scmp.le.s32.totalorder 1, %s14
      %p148 = scmp.lt.s32.totalorder %s14, 3
      %p149 = pnand %p147, %p148
      %p150 = pneg %p149
      // Predicated region
      $region9: #{tpu_custom_call.1} parent=5 // pred_check
        _
      $region10: #{tpu_custom_call.1} parent=5 // pred_check_branch
        %152 = sbr.rel (%p149) target = $region12
      $region11: #{tpu_custom_call.1} parent=5 // pred_region
        %s153 = ssub.s32 %s14, 1
        // Predicated region
        $region13: #{tpu_custom_call.1} parent=11 // pred_check
          %p154 = pneg %p35
        $region14: #{tpu_custom_call.1} parent=11 // pred_check_branch
          %156 = sbr.rel (%p154) target = $region16
        $region15: #{tpu_custom_call.1} parent=11 // pred_region
          _
        $region16: #{tpu_custom_call.1} parent=11 // pred_fallthru
          _
      $region12: #{tpu_custom_call.1} parent=5 // pred_fallthru
        _
      %p157 = scmp.lt.s32.totalorder %s14, 2
      // Predicated region
      $region17: #{tpu_custom_call.1} parent=5 // pred_check
        %p158 = pneg %p157
      $region18: #{tpu_custom_call.1} parent=5 // pred_check_branch
        %160 = sbr.rel (%p158) target = $region20
      $region19: #{tpu_custom_call.1} parent=5 // pred_region
        // Predicated region
        $region21: #{tpu_custom_call.1} parent=19 // pred_check
          %p161 = pneg %p55
        $region22: #{tpu_custom_call.1} parent=19 // pred_check_branch
          %163 = sbr.rel (%p161) target = $region24
        $region23: #{tpu_custom_call.1} parent=19 // pred_region
          %s164 = smul.u32 4, %s14
          %s165 = ssub.s32 7, %s164
          %p166 = scmp.lt.s32.totalorder %s165, 4
          %s167 = scalar_select %p166, %s165, 4
          %s168 = smul.u32 8, %s167
          %p169 = scmp.lt.s32.totalorder %s164, 6
          %s170 = scalar_select %p169, %s164, 6
          %s171 = smul.addr %s170, 8
          %s172 = scalar_lea.vmem %s1, %s171
          %s173 = smul.u32 4, %s14
          %s174 = ssub.s32 7, %s173
          %p175 = scmp.lt.s32.totalorder %s174, 4
          %s176 = scalar_select %p175, %s174, 4
          %s177 = smul.u32 8, %s176
        $region24: #{tpu_custom_call.1} parent=19 // pred_fallthru
          _
        // Predicated region
        $region25: #{tpu_custom_call.1} parent=19 // pred_check
          %p178 = pneg %p81
        $region26: #{tpu_custom_call.1} parent=19 // pred_check_branch
          %180 = sbr.rel (%p178) target = $region28
        $region27: #{tpu_custom_call.1} parent=19 // pred_region
          %s181 = smul.u32 4, %s14
          %s182 = ssub.s32 7, %s181
          %p183 = scmp.lt.s32.totalorder %s182, 4
          %s184 = scalar_select %p183, %s182, 4
          %s185 = smul.u32 8, %s184
          %p186 = scmp.lt.s32.totalorder %s181, 6
          %s187 = scalar_select %p186, %s181, 6
          %s188 = smul.addr %s187, 8
          %s189 = scalar_lea.vmem %s2, %s188
          %s190 = smul.u32 4, %s14
          %s191 = ssub.s32 7, %s190
          %p192 = scmp.lt.s32.totalorder %s191, 4
          %s193 = scalar_select %p192, %s191, 4
          %s194 = smul.u32 8, %s193
        $region28: #{tpu_custom_call.1} parent=19 // pred_fallthru
          _
        // Predicated region
        $region29: #{tpu_custom_call.1} parent=19 // pred_check
          %p195 = pneg %p107
        $region30: #{tpu_custom_call.1} parent=19 // pred_check_branch
          %197 = sbr.rel (%p195) target = $region32
        $region31: #{tpu_custom_call.1} parent=19 // pred_region
          %s198 = sand.u32 %s97, 1
          %s199 = scalar_lea.sflag [#allocation4], %s198
          %s200 = sand.u32 %s97, 1
          %s201 = smul.addr %s200, 32
          %s202 = scalar_lea.vmem [#allocation3], %s201
          %s203 = smul.u32 4, %s14
          %s204 = ssub.s32 7, %s203
          %p205 = scmp.lt.s32.totalorder %s204, 4
          %s206 = scalar_select %p205, %s204, 4
          %s207 = smul.u32 8, %s206
          %s208 = ssub.s32 32, %s207
          %s209 = sshll.u32 %s208, 4
          %210 = vsyncadd %s199, %s209
          %p211 = scmp.ne.s32.totalorder 0, %s207
          %s212 = smul.addr %s203, 8
          %s213 = scalar_lea.hbm %s3, %s212
          %s214 = smul.u32 8, %s206
          %s215 = sshll.u32 %s213, 4
          %s216 = int_to_ptr.hbm [resolvable:$true] %s215
          %s217 = sshll.u32 %s202, 4
          %s218 = int_to_ptr.vmem [resolvable:$true] %s217
          %s219 = sshll.u32 %s214, 4
          %223 = dma.hbm_to_vmem [thread:$0]  (%p211), %s216, %s219, %s218, %s199, 128, 128, 8
        $region32: #{tpu_custom_call.1} parent=19 // pred_fallthru
          _
      $region20: #{tpu_custom_call.1} parent=5 // pred_fallthru
        _
      %p224 = scmp.le.s32.totalorder 1, %s14
      %p225 = scmp.lt.s32.totalorder %s14, 3
      %p226 = pnand %p224, %p225
      %p227 = pneg %p226
      // Predicated region
      $region33: #{tpu_custom_call.1} parent=5 // pred_check
        _
      $region34: #{tpu_custom_call.1} parent=5 // pred_check_branch
        %229 = sbr.rel (%p226) target = $region36
      $region35: #{tpu_custom_call.1} parent=5 // pred_region
        %s230 = ssub.s32 %s14, 1
        %s231 = sand.u32 %s100, 1
        %s232 = scalar_lea.sflag [#allocation4], %s231
        %s233 = sand.u32 %s100, 1
        %s234 = smul.addr %s233, 32
        %s235 = scalar_lea.vmem [#allocation3], %s234
        // Predicated region
        $region37: #{tpu_custom_call.1} parent=35 // pred_check
          %p236 = pneg %p113
        $region38: #{tpu_custom_call.1} parent=35 // pred_check_branch
          %238 = sbr.rel (%p236) target = $region40
        $region39: #{tpu_custom_call.1} parent=35 // pred_region
          %240 = dma.done %s232, 512
        $region40: #{tpu_custom_call.1} parent=35 // pred_fallthru
          _
        %p241 = pneg %p35
        %p242 = pneg %p32
        %s243 = smul.u32 4, %s19
        %s244 = ssub.s32 7, %s243
        %p245 = scmp.lt.s32.totalorder %s244, 4
        %s246 = scalar_select %p245, %s244, 4
        %s247 = smul.u32 8, %s246
        %p248 = scmp.lt.s32.totalorder %s243, 6
        %s249 = scalar_select %p248, %s243, 6
        %s250 = smul.addr %s249, 8
        %s251 = scalar_lea.vmem %s1, %s250
        %p252 = pneg %p61
        %p253 = pneg %p58
        %s254 = smul.u32 4, %s19
        %s255 = ssub.s32 7, %s254
        %p256 = scmp.lt.s32.totalorder %s255, 4
        %s257 = scalar_select %p256, %s255, 4
        %s258 = smul.u32 8, %s257
        %p259 = scmp.lt.s32.totalorder %s254, 6
        %s260 = scalar_select %p259, %s254, 6
        %s261 = smul.addr %s260, 8
        %s262 = scalar_lea.vmem %s2, %s261
        %p263 = pneg %p87
        %p264 = pneg %p84
        %s265 = sand.u32 %s100, 1
        %s266 = scalar_lea.sflag [#allocation4], %s265
        %s267 = sand.u32 %s100, 1
        %s268 = smul.addr %s267, 32
        %s269 = scalar_lea.vmem [#allocation3], %s268
        %p270 = pneg %p113
        %p271 = pneg %p110
        %p272 = pneg %p139
        %p273 = pneg %p136
        %s274 = sand.u32 %s126, 1
        %s275 = sand.u32 %s126, 1
        %s276 = smul.addr %s275, 32
        %s277 = scalar_lea.vmem [#allocation5], %s276
        %s278 = smul.u32 4, %s19
        %s279 = ssub.s32 7, %s278
        %p280 = scmp.lt.s32.totalorder %s279, 4
        %s281 = scalar_select %p280, %s279, 4
        %s282 = smul.u32 8, %s281
        %p283 = scmp.lt.s32.totalorder %s278, 6
        %s284 = scalar_select %p283, %s278, 6
        %s285 = smul.addr %s284, 8
        %s286 = scalar_lea.vmem %s1, %s285
        %s287 = smul.u32 4, %s19
        %s288 = ssub.s32 7, %s287
        %p289 = scmp.lt.s32.totalorder %s288, 4
        %s290 = scalar_select %p289, %s288, 4
        %s291 = smul.u32 8, %s290
        %s292 = smul.u32 4, %s19
        %s293 = ssub.s32 7, %s292
        %p294 = scmp.lt.s32.totalorder %s293, 4
        %s295 = scalar_select %p294, %s293, 4
        %s296 = smul.u32 8, %s295
        %p297 = scmp.lt.s32.totalorder %s292, 6
        %s298 = scalar_select %p297, %s292, 6
        %s299 = smul.addr %s298, 8
        %s300 = scalar_lea.vmem %s2, %s299
        %s301 = smul.u32 4, %s19
        %s302 = ssub.s32 7, %s301
        %p303 = scmp.lt.s32.totalorder %s302, 4
        %s304 = scalar_select %p303, %s302, 4
        %s305 = smul.u32 8, %s304
        %s306 = smul.u32 4, %s19
        %s307 = ssub.s32 7, %s306
        %p308 = scmp.lt.s32.totalorder %s307, 4
        %s309 = scalar_select %p308, %s307, 4
        %s310 = smul.u32 8, %s309
        %s311 = smul.u32 4, %s19
        %s312 = ssub.s32 7, %s311
        %p313 = scmp.lt.s32.totalorder %s312, 4
        %s314 = scalar_select %p313, %s312, 4
        %s315 = smul.u32 8, %s314
        %s316 = sld [smem:[#allocation2]]
        %s317 = smul.f32 %s316, -0.5
        %s318 = smul.f32 %s317, %s316
        %v319 = vld [vmem:[%s286] sm:$0xff]
        %v320 = vld [vmem:[%s286 + $0x8] sm:$0xff]
        %v321 = vld [vmem:[%s286 + $0x10] sm:$0xff]
        %v322 = vld [vmem:[%s286 + $0x18] sm:$0xff]
        %v323 = vld [vmem:[%s300] sm:$0xff]
        %v324 = vld [vmem:[%s300 + $0x8] sm:$0xff]
        %v325 = vld [vmem:[%s300 + $0x10] sm:$0xff]
        %v326 = vld [vmem:[%s300 + $0x18] sm:$0xff]
        %v327 = vld [vmem:[%s235] sm:$0xff]
        %v328 = vld [vmem:[%s235 + $0x8] sm:$0xff]
        %v329 = vld [vmem:[%s235 + $0x10] sm:$0xff]
        %v330 = vld [vmem:[%s235 + $0x18] sm:$0xff]
        %332 = vset.pattern.permute.xlu0 0
        %333 = vperm.xlu0 %332, %v319
        %v334 = vpop.permute.xlu0 %333
        %337 = vset.pattern.permute.xlu0 0
        %338 = vperm.xlu0 %337, %v320
        %v339 = vpop.permute.xlu0 %338
        %342 = vset.pattern.permute.xlu0 0
        %343 = vperm.xlu0 %342, %v321
        %v344 = vpop.permute.xlu0 %343
        %347 = vset.pattern.permute.xlu0 0
        %348 = vperm.xlu0 %347, %v322
        %v349 = vpop.permute.xlu0 %348
        %v351 = vsub.f32 %v334, %v323
        %v352 = vsub.f32 %v339, %v324
        %v353 = vsub.f32 %v344, %v325
        %v354 = vsub.f32 %v349, %v326
        %v355 = vmul.f32 %v351, %v351
        %v356 = vmul.f32 %v352, %v352
        %v357 = vmul.f32 %v353, %v353
        %v358 = vmul.f32 %v354, %v354
        %v359 = vstv %s318
        %v360 = vmul.f32 %v359, %v355
        %v361 = vmul.f32 %v359, %v356
        %v362 = vmul.f32 %v359, %v357
        %v363 = vmul.f32 %v359, %v358
        %vm364 = vcmask 408576
        %v365 = vsel %vm364, %v360, -inf
        %366 = vmax.xlane.f32.xlu0 %v365
        %v367 = vpop.xlane.xlu0 %366
        %v368 = vsel %vm364, %v361, -inf
        %369 = vmax.xlane.f32.xlu0 %v368
        %v370 = vpop.xlane.xlu0 %369
        %v371 = vsel %vm364, %v362, -inf
        %372 = vmax.xlane.f32.xlu0 %v371
        %v373 = vpop.xlane.xlu0 %372
        %v374 = vsel %vm364, %v363, -inf
        %375 = vmax.xlane.f32.xlu0 %v374
        %v376 = vpop.xlane.xlu0 %375
        %v377 = vsub.f32 %v360, %v367
        %v378 = vsub.f32 %v361, %v370
        %v379 = vsub.f32 %v362, %v373
        %v380 = vsub.f32 %v363, %v376
        %v381 = vmul.f32 %v377, 1.442695
        %v382 = vpow.pop %v381
        %v383 = vmul.f32 %v378, 1.442695
        %v384 = vpow.pop %v383
        %v385 = vmul.f32 %v379, 1.442695
        %v386 = vpow.pop %v385
        %v387 = vmul.f32 %v380, 1.442695
        %v388 = vpow.pop %v387
        %v390 = vsel %vm364, %v382, 0
        %v393 = vsel %vm364, %v384, 0
        %v396 = vsel %vm364, %v386, 0
        %v399 = vsel %vm364, %v388, 0
        %vm401 = vcmask 1041408
        %v403 = vsel %vm401, 1.0, 0
        %405 = vmatpush.msra.mxu0 0.0
        %406 = vmatpush.msra.mxu0 0.0
        %407 = vmatpush.msra.mxu0 0.0
        %408 = vmatpush.msra.mxu0 0.0
        %409 = vmatpush.msra.mxu0 0.0
        %410 = vmatpush.msra.mxu0 0.0
        %411 = vmatpush.msra.mxu0 0.0
        %412 = vmatpush.msra.mxu0 0.0
        %413 = vmatpush.msra.mxu0 0.0
        %414 = vmatpush.msra.mxu0 %v403
        %415 = vmatpush.msra.mxu0 1.0
        %416 = vmatpush.msra.mxu0 1.0
        %417 = vmatpush.msra.mxu0 1.0
        %418 = vmatpush.msra.mxu0 1.0
        %419 = vmatpush.msra.mxu0 1.0
        %420 = vmatpush.msra.mxu0 1.0
        %421 = vmatmul.f32.gmra.mxu0 %v390
        %v422 = vpop.f32.mrf.mxu0
        %v423 = vadd.f32 0.0, %v422
        %424 = vmatmul.f32.gmra.mxu0 %v393
        %v425 = vpop.f32.mrf.mxu0
        %v426 = vadd.f32 0.0, %v425
        %427 = vmatmul.f32.gmra.mxu0 %v396
        %v428 = vpop.f32.mrf.mxu0
        %v429 = vadd.f32 0.0, %v428
        %430 = vmatmul.f32.gmra.mxu0 %v399
        %v431 = vpop.f32.mrf.mxu0
        %v432 = vadd.f32 0.0, %v431
        %433 = vdwg.mxu0
        %v434 = vmul.f32 %v382, %v327
        %v435 = vmul.f32 %v384, %v328
        %v436 = vmul.f32 %v386, %v329
        %v437 = vmul.f32 %v388, %v330
        %v439 = vsel %vm364, %v434, 0
        %v442 = vsel %vm364, %v435, 0
        %v445 = vsel %vm364, %v436, 0
        %v448 = vsel %vm364, %v437, 0
        %450 = vmatpush.msra.mxu0 0.0
        %451 = vmatpush.msra.mxu0 0.0
        %452 = vmatpush.msra.mxu0 0.0
        %453 = vmatpush.msra.mxu0 0.0
        %454 = vmatpush.msra.mxu0 0.0
        %455 = vmatpush.msra.mxu0 0.0
        %456 = vmatpush.msra.mxu0 0.0
        %457 = vmatpush.msra.mxu0 0.0
        %458 = vmatpush.msra.mxu0 0.0
        %459 = vmatpush.msra.mxu0 %v403
        %460 = vmatpush.msra.mxu0 1.0
        %461 = vmatpush.msra.mxu0 1.0
        %462 = vmatpush.msra.mxu0 1.0
        %463 = vmatpush.msra.mxu0 1.0
        %464 = vmatpush.msra.mxu0 1.0
        %465 = vmatpush.msra.mxu0 1.0
        %466 = vmatmul.f32.gmra.mxu0 %v439
        %v467 = vpop.f32.mrf.mxu0
        %v468 = vadd.f32 0.0, %v467
        %469 = vmatmul.f32.gmra.mxu0 %v442
        %v470 = vpop.f32.mrf.mxu0
        %v471 = vadd.f32 0.0, %v470
        %472 = vmatmul.f32.gmra.mxu0 %v445
        %v473 = vpop.f32.mrf.mxu0
        %v474 = vadd.f32 0.0, %v473
        %475 = vmatmul.f32.gmra.mxu0 %v448
        %v476 = vpop.f32.mrf.mxu0
        %v477 = vadd.f32 0.0, %v476
        %478 = vdwg.mxu0
        %v479 = vrcp.pop %v423
        %v480 = vrcp.pop %v426
        %v481 = vrcp.pop %v429
        %v482 = vrcp.pop %v432
        %v483 = vmul.f32 %v468, %v479
        %v484 = vmul.f32 %v471, %v480
        %v485 = vmul.f32 %v474, %v481
        %v486 = vmul.f32 %v477, %v482
        %vm487 = vcmask 7168
        %488 = vst.msk [vmem:[%s277] sm:$0xff] %vm487, %v483
        %489 = vst.msk [vmem:[%s277 + $0x8] sm:$0xff] %vm487, %v484
        %490 = vst.msk [vmem:[%s277 + $0x10] sm:$0xff] %vm487, %v485
        %491 = vst.msk [vmem:[%s277 + $0x18] sm:$0xff] %vm487, %v486
        %s492 = sand.u32 %s126, 1
        %s493 = sand.u32 %s126, 1
        %s494 = smul.addr %s493, 32
        %s495 = scalar_lea.vmem [#allocation5], %s494
        // Predicated region
        $region41: #{tpu_custom_call.1} parent=35 // pred_check
          %p496 = pneg %p136
        $region42: #{tpu_custom_call.1} parent=35 // pred_check_branch
          %498 = sbr.rel (%p496) target = $region44
        $region43: #{tpu_custom_call.1} parent=35 // pred_region
          %s499 = smul.u32 4, %s19
          %s500 = ssub.s32 7, %s499
          %p501 = scmp.lt.s32.totalorder %s500, 4
          %s502 = scalar_select %p501, %s500, 4
          %s503 = smul.u32 8, %s502
          %p504 = scmp.ne.s32.totalorder 0, %s503
          %s505 = smul.addr %s499, 8
          %s506 = scalar_lea.vmem %s4, %s505
          // Predicated region
          $region45: #{tpu_custom_call.1} parent=43 // pred_check
            %p507 = pneg %p504
          $region46: #{tpu_custom_call.1} parent=43 // pred_check_branch
            %509 = sbr.rel (%p507) target = $region48
          $region47: #{tpu_custom_call.1} parent=43 // pred_region
            // Predicated region
            $region49: #{tpu_custom_call.1} parent=47 // pred_check
              _
            $region50: #{tpu_custom_call.1} parent=47 // pred_check_branch
              %511 = sbr.rel (0) target = $region52
            $region51: #{tpu_custom_call.1} parent=47 // pred_region
              // Predicated region
              $region71: #{tpu_custom_call.1} parent=51 // pred_check
                _
              $region72: #{tpu_custom_call.1} parent=51 // pred_check_branch
                %567 = sbr.rel (0) target = $region74
              $region73: #{tpu_custom_call.1} parent=51 // pred_region
                %s568 = sshrl.u32 %s502, 2
                // While loop
                $region75: #{tpu_custom_call.1} parent=73 // loop_pre_header
                  _
                $region76: #{tpu_custom_call.1} parent=73 // loop_header
                  %s570 = sphi 0, %s572
                  %p571 = scmp.ge.s32.totalorder %s570, %s568
                  %s575 = sphi 0, %s588
                  %s576 = sphi %s495, %s591
                  %s577 = sphi %s506, %s592
                $region77: #{tpu_custom_call.1} parent=73 // loop_header_branch
                  %574 = sbr.rel (%p571) target = $region81
                $region78: #{tpu_custom_call.1} parent=73 // loop_body
                  %v578 = vld [vmem:[%s576] sm:$0xff]
                  %579 = vst [vmem:[%s577] sm:$0xff] %v578
                  %v580 = vld [vmem:[%s576 + $0x8] sm:$0xff]
                  %581 = vst [vmem:[%s577 + $0x8] sm:$0xff] %v580
                  %v582 = vld [vmem:[%s576 + $0x10] sm:$0xff]
                  %583 = vst [vmem:[%s577 + $0x10] sm:$0xff] %v582
                  %v584 = vld [vmem:[%s576 + $0x18] sm:$0xff]
                  %585 = vst [vmem:[%s577 + $0x18] sm:$0xff] %v584
                  %s586 = sadd.s32 1, %s575
                  %p587 = scmp.ge.s32.totalorder %s586, %s568
                  %s588 = scalar_select %p587, 0, %s586
                  %s589 = smul.u32 %s588, 32
                  %s590 = smul.u32 %s588, 32
                  %s591 = scalar_lea.vmem %s495, %s589 [#allocation5]
                  %s592 = scalar_lea.vmem %s506, %s590
                $region79: #{tpu_custom_call.1} parent=73 // loop_footer
                  %s572 = sadd.s32 %s570, 1
                $region80: #{tpu_custom_call.1} parent=73 // loop_footer_branch
                  %569 = sbr.rel target = $region76
                $region81: #{tpu_custom_call.1} parent=73 // loop_exit
                  _
                %s593 = sshrl.u32 %s502, 2
                %s594 = sand.u32 %s502, 3
                %s595 = smul.u32 %s593, 4
                %s596 = smul.u32 8, %s595
                %s597 = scalar_lea.vmem %s495, %s596 [#allocation5]
                %s598 = smul.u32 8, %s595
                %s599 = scalar_lea.vmem %s506, %s598
                // While loop
                $region82: #{tpu_custom_call.1} parent=73 // loop_pre_header
                  _
                $region83: #{tpu_custom_call.1} parent=73 // loop_header
                  %s601 = sphi 0, %s603
                  %p602 = scmp.ge.s32.totalorder %s601, %s594
                  %s606 = sphi 0, %s613
                  %s607 = sphi %s597, %s616
                  %s608 = sphi %s599, %s617
                $region84: #{tpu_custom_call.1} parent=73 // loop_header_branch
                  %605 = sbr.rel (%p602) target = $region88
                $region85: #{tpu_custom_call.1} parent=73 // loop_body
                  %v609 = vld [vmem:[%s607] sm:$0xff]
                  %610 = vst [vmem:[%s608] sm:$0xff] %v609
                  %s611 = sadd.s32 1, %s606
                  %p612 = scmp.ge.s32.totalorder %s611, %s594
                  %s613 = scalar_select %p612, 0, %s611
                  %s614 = smul.u32 %s613, 8
                  %s615 = smul.u32 %s613, 8
                  %s616 = scalar_lea.vmem %s597, %s614 [#allocation5]
                  %s617 = scalar_lea.vmem %s599, %s615
                $region86: #{tpu_custom_call.1} parent=73 // loop_footer
                  %s603 = sadd.s32 %s601, 1
                $region87: #{tpu_custom_call.1} parent=73 // loop_footer_branch
                  %600 = sbr.rel target = $region83
                $region88: #{tpu_custom_call.1} parent=73 // loop_exit
                  _
              $region74: #{tpu_custom_call.1} parent=51 // pred_fallthru
                _
              // Predicated region
              $region89: #{tpu_custom_call.1} parent=51 // pred_check
                _
              $region90: #{tpu_custom_call.1} parent=51 // pred_check_branch
                %619 = sbr.rel target = $region92
              $region91: #{tpu_custom_call.1} parent=51 // pred_region
                _
              $region92: #{tpu_custom_call.1} parent=51 // pred_fallthru
                _
            $region52: #{tpu_custom_call.1} parent=47 // pred_fallthru
              _
            // Predicated region
            $region53: #{tpu_custom_call.1} parent=47 // pred_check
              _
            $region54: #{tpu_custom_call.1} parent=47 // pred_check_branch
              %513 = sbr.rel target = $region56
            $region55: #{tpu_custom_call.1} parent=47 // pred_region
              %s515 = ssub.s32 256, 1
              %s516 = sshrl.u32 %s502, 2
              // While loop
              $region57: #{tpu_custom_call.1} parent=55 // loop_pre_header
                _
              $region58: #{tpu_custom_call.1} parent=55 // loop_header
                %s518 = sphi 0, %s520
                %p519 = scmp.ge.s32.totalorder %s518, %s516
                %s523 = sphi 0, %s536
                %s524 = sphi %s495, %s539
                %s525 = sphi %s506, %s540
              $region59: #{tpu_custom_call.1} parent=55 // loop_header_branch
                %522 = sbr.rel (%p519) target = $region63
              $region60: #{tpu_custom_call.1} parent=55 // loop_body
                %v526 = vld [vmem:[%s524] sm:%s515]
                %527 = vst [vmem:[%s525] sm:%s515] %v526
                %v528 = vld [vmem:[%s524 + $0x8] sm:%s515]
                %529 = vst [vmem:[%s525 + $0x8] sm:%s515] %v528
                %v530 = vld [vmem:[%s524 + $0x10] sm:%s515]
                %531 = vst [vmem:[%s525 + $0x10] sm:%s515] %v530
                %v532 = vld [vmem:[%s524 + $0x18] sm:%s515]
                %533 = vst [vmem:[%s525 + $0x18] sm:%s515] %v532
                %s534 = sadd.s32 1, %s523
                %p535 = scmp.ge.s32.totalorder %s534, %s516
                %s536 = scalar_select %p535, 0, %s534
                %s537 = smul.u32 %s536, 32
                %s538 = smul.u32 %s536, 32
                %s539 = scalar_lea.vmem %s495, %s537 [#allocation5]
                %s540 = scalar_lea.vmem %s506, %s538
              $region61: #{tpu_custom_call.1} parent=55 // loop_footer
                %s520 = sadd.s32 %s518, 1
              $region62: #{tpu_custom_call.1} parent=55 // loop_footer_branch
                %517 = sbr.rel target = $region58
              $region63: #{tpu_custom_call.1} parent=55 // loop_exit
                _
              %s541 = sshrl.u32 %s502, 2
              %s542 = sand.u32 %s502, 3
              %s543 = smul.u32 %s541, 4
              %s544 = smul.u32 8, %s543
              %s545 = scalar_lea.vmem %s495, %s544 [#allocation5]
              %s546 = smul.u32 8, %s543
              %s547 = scalar_lea.vmem %s506, %s546
              // While loop
              $region64: #{tpu_custom_call.1} parent=55 // loop_pre_header
                _
              $region65: #{tpu_custom_call.1} parent=55 // loop_header
                %s549 = sphi 0, %s551
                %p550 = scmp.ge.s32.totalorder %s549, %s542
                %s554 = sphi 0, %s561
                %s555 = sphi %s545, %s564
                %s556 = sphi %s547, %s565
              $region66: #{tpu_custom_call.1} parent=55 // loop_header_branch
                %553 = sbr.rel (%p550) target = $region70
              $region67: #{tpu_custom_call.1} parent=55 // loop_body
                %v557 = vld [vmem:[%s555] sm:%s515]
                %558 = vst [vmem:[%s556] sm:%s515] %v557
                %s559 = sadd.s32 1, %s554
                %p560 = scmp.ge.s32.totalorder %s559, %s542
                %s561 = scalar_select %p560, 0, %s559
                %s562 = smul.u32 %s561, 8
                %s563 = smul.u32 %s561, 8
                %s564 = scalar_lea.vmem %s545, %s562 [#allocation5]
                %s565 = scalar_lea.vmem %s547, %s563
              $region68: #{tpu_custom_call.1} parent=55 // loop_footer
                %s551 = sadd.s32 %s549, 1
              $region69: #{tpu_custom_call.1} parent=55 // loop_footer_branch
                %548 = sbr.rel target = $region65
              $region70: #{tpu_custom_call.1} parent=55 // loop_exit
                _
            $region56: #{tpu_custom_call.1} parent=47 // pred_fallthru
              _
          $region48: #{tpu_custom_call.1} parent=43 // pred_fallthru
            _
          %620 = vnop
        $region44: #{tpu_custom_call.1} parent=35 // pred_fallthru
          _
      $region36: #{tpu_custom_call.1} parent=5 // pred_fallthru
        _
      %p621 = scmp.le.s32.totalorder 2, %s14
      // Predicated region
      $region93: #{tpu_custom_call.1} parent=5 // pred_check
        %p622 = pneg %p621
      $region94: #{tpu_custom_call.1} parent=5 // pred_check_branch
        %624 = sbr.rel (%p622) target = $region96
      $region95: #{tpu_custom_call.1} parent=5 // pred_region
        %s625 = ssub.s32 %s14, 2
        // Predicated region
        $region97: #{tpu_custom_call.1} parent=95 // pred_check
          %p626 = pneg %p142
        $region98: #{tpu_custom_call.1} parent=95 // pred_check_branch
          %628 = sbr.rel (%p626) target = $region100
        $region99: #{tpu_custom_call.1} parent=95 // pred_region
          %s629 = sand.u32 %s127, 1
          %s630 = sand.u32 %s127, 1
          %s631 = smul.addr %s630, 32
          %s632 = scalar_lea.vmem [#allocation5], %s631
        $region100: #{tpu_custom_call.1} parent=95 // pred_fallthru
          _
      $region96: #{tpu_custom_call.1} parent=5 // pred_fallthru
        _
    $region6: #{tpu_custom_call.1} parent=1 // loop_footer
      %s18 = sadd.s32 1, %s14
    $region7: #{tpu_custom_call.1} parent=1 // loop_footer_branch
      %13 = sbr.rel target = $region3
    $region8: #{tpu_custom_call.1} parent=1 // loop_exit
      _
    %633 = vsyncpa [#allocation4], 1
    %s634 = scalar_lea.sflag [#allocation4], 1
    %635 = vsyncpa %s634, 1

</llo_original>
